<compile_context>
chip_gen: v5e
topology: v5e:2x2
jax: 0.10.0
libtpu: 0.0.40
codegen_flags: <defaults>
</compile_context>

<pallas_src>
import math

import jax
import jax.numpy as jnp
from jax.experimental import pallas as pl
from jax.experimental.pallas import tpu as pltpu


def _scale_ensemble_kernel(x_ref, w_ref, o_ref):
    # x tile stays in its source dtype all the way into VMEM; promote on the
    # VPU (VALU slot has huge slack in a mem-bound kernel), multiply by the
    # grid-resident (1, kd_chunk) weight row (sublane-broadcast), store wide.
    o_ref[...] = x_ref[...].astype(o_ref.dtype) * w_ref[...]


def _vmem_capacity_bytes() -> int:
    try:
        return int(pltpu.get_tpu_info().vmem_capacity_bytes)
    except Exception:
        return 64 << 20  # conservative: v7x per-TensorCore VMEM


def _choose_tiles(b, kd, x_isz, o_isz, pack, target_bytes):
    """Pick (batch_tile, kd_tile).

    `pack` = sublane pack factor of the x dtype (8 f32 / 16 bf16 / 32 int8).
    `target_bytes` ~ bytes of one (x + out) tile pair; double-buffering keeps
    the true footprint ~2x that, well inside every chip's VMEM.
    """
    row_bytes = kd * (x_isz + o_isz)

    # Case A: full rows are cheap — tile only the batch axis.
    if row_bytes * pack <= target_bytes:
        tb = max(pack, (target_bytes // row_bytes) // pack * pack)
        if tb >= b:
            if b > pack:
                # Ensure >= 2 grid steps so both v7x TensorCores get work.
                tb = min(b, ((pl.cdiv(b, 2) + pack - 1) // pack) * pack)
            else:
                tb = b
        return tb, kd

    # Case B: even one pack-height slab of full rows exceeds the target —
    # tile the k*d axis in 128-lane multiples so double-buffering fits VMEM.
    tb = pack if b >= pack else b
    kd_chunk = target_bytes // max(tb * (x_isz + o_isz), 1)
    kd_chunk = max(128, (kd_chunk // 128) * 128)
    kd_chunk = min(kd_chunk, kd)
    return tb, kd_chunk


def scale_ensemble(x: jax.Array, weight: jax.Array) -> jax.Array:
    """Computes x * weight, weight of shape (k, d) broadcast over leading dims."""
    assert x.ndim >= 2
    k, d = weight.shape
    assert x.shape[-2:] == (k, d)

    # PyTorch type-promotion for x * weight. Only the tiny weight is cast in
    # the wrapper; x is promoted per-tile inside the kernel (no extra HBM pass).
    out_dtype = jnp.promote_types(x.dtype, weight.dtype)
    weight = weight.astype(out_dtype)

    lead_shape = x.shape[:-2]
    b = math.prod(lead_shape)
    kd = k * d
    if b == 0 or kd == 0:
        return jnp.zeros((*lead_shape, k, d), out_dtype)

    # Lane-dense layout: collapse (k, d) into the lane axis.
    x2 = x.reshape(b, kd)
    w2 = weight.reshape(1, kd)

    # If k*d is not a multiple of 128, fold r batch rows into the lane axis
    # (free reshape; weight row tiled r times) so output stores stay unmasked.
    if kd % 128 != 0:
        r = 128 // math.gcd(kd, 128)
        if r > 1 and b % r == 0:
            x2 = x2.reshape(b // r, r * kd)
            w2 = jnp.tile(w2, (1, r))
    b_eff, kd_eff = x2.shape

    x_isz = jnp.dtype(x.dtype).itemsize
    o_isz = jnp.dtype(out_dtype).itemsize
    pack = 8 * max(1, 4 // x_isz)  # sublane pack of the (possibly narrow) x dtype

    vmem_cap = _vmem_capacity_bytes()
    if vmem_cap >= (96 << 20):            # v5e / v6e: 128 MiB VMEM
        target_bytes, vmem_ceiling = 8 << 20, 64 << 20
    else:                                  # v7x: 64 MiB per TensorCore
        target_bytes, vmem_ceiling = 4 << 20, 48 << 20

    tb, kd_chunk = _choose_tiles(b_eff, kd_eff, x_isz, o_isz, pack, target_bytes)
    grid = (pl.cdiv(b_eff, tb), pl.cdiv(kd_eff, kd_chunk))

    # VMEM budget: double-buffered x + out tiles plus the (small) weight chunk.
    tile_bytes = tb * kd_chunk * (x_isz + o_isz) + kd_chunk * o_isz
    vmem_limit = int(min(max(2 * tile_bytes + (8 << 20), 16 << 20), vmem_ceiling))

    out = pl.pallas_call(
        _scale_ensemble_kernel,
        out_shape=jax.ShapeDtypeStruct((b_eff, kd_eff), out_dtype),
        grid_spec=pl.GridSpec(
            grid=grid,
            in_specs=[
                pl.BlockSpec((tb, kd_chunk), lambda i, j: (i, j)),   # x tile
                pl.BlockSpec((1, kd_chunk), lambda i, j: (0, j)),    # weight row
            ],
            out_specs=pl.BlockSpec((tb, kd_chunk), lambda i, j: (i, j)),
        ),
        compiler_params=pltpu.CompilerParams(
            dimension_semantics=("parallel", "parallel"),
            vmem_limit_bytes=vmem_limit,
        ),
    )(x2, w2)

    return out.reshape(*lead_shape, k, d)


def init_scale_ensemble_weight(key, k: int, d: int, init: str) -> jax.Array:
    """Deterministic re-implementation of ScaleEnsemble.reset_parameters."""
    if init == "ones":
        return jnp.ones((k, d), jnp.float32)
    elif init == "normal":
        return jax.random.normal(key, (k, d), jnp.float32)
    elif init == "random-signs":
        bern = jax.random.bernoulli(key, 0.5, (k, d)).astype(jnp.float32)
        return bern * 2.0 - 1.0
    else:
        raise ValueError(f"Unknown weight_init: {init}")


if __name__ == "__main__":
    key = jax.random.PRNGKey(0)
    k_x, k_w, k_x2, k_x3, k_w2 = jax.random.split(key, 5)

    # 1) Base case: batch=2, ensemble k=8, hidden d=32 (k*d = 256 lanes), f32.
    B, K, D = 2, 8, 32
    x = jax.random.normal(k_x, (B, K, D), jnp.float32)
    w = init_scale_ensemble_weight(k_w, K, D, init="random-signs")
    out = jax.block_until_ready(scale_ensemble(x, w))
    ref = x * w[None, :, :]
    assert out.shape == (B, K, D) and out.dtype == ref.dtype
    assert jnp.allclose(out, ref, atol=1e-6), "mismatch vs reference (f32)"

    # 2) Mixed dtype (bf16 activations, f32 weight): exercises the in-kernel cast.
    xb = jax.random.normal(k_x2, (16, K, D), jnp.float32).astype(jnp.bfloat16)
    outb = jax.block_until_ready(scale_ensemble(xb, w))
    refb = xb.astype(jnp.float32) * w[None, :, :]
    assert outb.dtype == jnp.float32
    assert jnp.allclose(outb, refb, atol=1e-6), "mismatch vs reference (bf16 x)"

    # 3) Rank-4 leading dims with k*d not a multiple of 128 (lane-fold path:
    #    kd = 96, fold r = 4 batch rows into the lane axis).
    K2, D2 = 4, 24
    w2 = init_scale_ensemble_weight(k_w2, K2, D2, init="normal")
    x3 = jax.random.normal(k_x3, (2, 6, K2, D2), jnp.float32)
    out3 = jax.block_until_ready(scale_ensemble(x3, w2))
    ref3 = x3 * w2[None, None, :, :]
    assert out3.shape == (2, 6, K2, D2)
    assert jnp.allclose(out3, ref3, atol=1e-6), "mismatch vs reference (rank-4)"

    print("KERNEL_OK")
</pallas_src>

<mosaic_0001>
module attributes {stable_mosaic.version = 11 : i64} {
  func.func @_scale_ensemble_kernel(%arg0: i32, %arg1: i32, %arg2: memref<2x256xf32, #tpu.memory_space<vmem>>, %arg3: memref<1x256xf32, #tpu.memory_space<vmem>>, %arg4: memref<2x256xf32, #tpu.memory_space<vmem>>) attributes {dimension_semantics = [#tpu.dimension_semantics<parallel>, #tpu.dimension_semantics<parallel>], iteration_bounds = array<i64: 1, 1>, scalar_prefetch = 0 : i64, scratch_operands = 0 : i64, tpu.core_type = #tpu.core_type<tc>, window_params = [{transform_indices = @transform_0, window_bounds = array<i64: 2, 256>}, {transform_indices = @transform_1, window_bounds = array<i64: 1, 256>}, {transform_indices = @transform_2, window_bounds = array<i64: 2, 256>}]} {
    %c0 = arith.constant 0 : index
    %c0_0 = arith.constant 0 : index
    %0 = vector.load %arg2[%c0, %c0_0] : memref<2x256xf32, #tpu.memory_space<vmem>>, vector<2x256xf32>
    %c0_1 = arith.constant 0 : index
    %c0_2 = arith.constant 0 : index
    %1 = vector.load %arg3[%c0_1, %c0_2] : memref<1x256xf32, #tpu.memory_space<vmem>>, vector<1x256xf32>
    %2 = vector.broadcast %1 : vector<1x256xf32> to vector<2x256xf32>
    %3 = arith.mulf %0, %2 : vector<2x256xf32>
    %c0_3 = arith.constant 0 : index
    %c0_4 = arith.constant 0 : index
    %4 = vector.load %arg4[%c0_3, %c0_4] : memref<2x256xf32, #tpu.memory_space<vmem>>, vector<2x256xf32>
    tpu.vector_store %arg4[%c0_3, %c0_4], %3 {strides = array<i32>} : memref<2x256xf32, #tpu.memory_space<vmem>>, vector<2x256xf32>,
    return
  }
  func.func @transform_0(%arg0: i32, %arg1: i32) -> (i32, i32) {
    %c0_i32 = arith.constant 0 : i32
    return %arg0, %arg1 : i32, i32
  }
  func.func @transform_1(%arg0: i32, %arg1: i32) -> (i32, i32) {
    %c0_i32 = arith.constant 0 : i32
    %c0_i32_0 = arith.constant 0 : i32
    return %c0_i32, %arg1 : i32, i32
  }
  func.func @transform_2(%arg0: i32, %arg1: i32) -> (i32, i32) {
    %c0_i32 = arith.constant 0 : i32
    return %arg0, %arg1 : i32, i32
  }
}

</mosaic_0001>

<llo_original>
// kernel: tpu_custom_call.1
$region0: #{tpu_custom_call.1}
  #allocation0 [shape = 'u32[]', space=smem, size = 0x4, offset = 0x4, fixed_abs, tag = 'smem constant byte address 0x4 - core index']
  #allocation1 [shape = 'u32[72,128]{1,0:T(1,128)}', space=vmem, size = 0x9000, scoped, tag = 'internal scratch']
  %s0 = inlined_call_operand.hbm [shape: f32[2,256], index: 0, kind: input, shape index: {}]
  %s1 = inlined_call_operand.hbm [shape: f32[1,256], index: 1, kind: input, shape index: {}]
  %s2 = inlined_call_operand.hbm [shape: f32[2,256], index: 2, kind: output, shape index: {}]
  %s3 = sld [smem:[#allocation0]]
  $region26: #{tpu_custom_call.1} parent=0
    _
  %s5 = ssub.s32 1, %s3
  %s6 = scalar_select 0, %s5, %s3
  $region1: #{tpu_custom_call.1} parent=0
    #allocation2 [shape = 'u8[2048]{0}', space=vmem, size = 0x800, scoped, tag = 'input window, operand 0, single buffered']
    #allocation3 [shape = 's32[1]{0}', space=sflag, size = 0x4, scoped, tag = 'scoped memory for tpu_custom_call.1']
    #allocation4 [shape = 's32[1]{0}', space=sflag, size = 0x4, scoped, tag = 'scoped memory for tpu_custom_call.1']
    #allocation5 [shape = 'u8[1024]{0}', space=vmem, size = 0x400, scoped, tag = 'input window, operand 1, single buffered']
    #allocation6 [shape = 's32[1]{0}', space=sflag, size = 0x4, scoped, tag = 'scoped memory for tpu_custom_call.1']
    #allocation7 [shape = 'u8[2048]{0}', space=vmem, size = 0x800, scoped, tag = 'output window, operand 0, single buffered']
    %7 = vsyncpa [#allocation3], 0
    %8 = vsyncpa [#allocation6], 0
    %9 = vsyncpa [#allocation4], 0
    // Predicated region
    $region2: #{tpu_custom_call.1} parent=1 // pred_check
      _
    $region3: #{tpu_custom_call.1} parent=1 // pred_check_branch
      %11 = sbr.rel (0) target = $region5
    $region4: #{tpu_custom_call.1} parent=1 // pred_region
      %13 = vsyncadd [#allocation3], 0
      %s15 = sshll.u32 %s0, 4
      %s16 = int_to_ptr.hbm [resolvable:$true] %s15
      %s17 = sshll.u32 [#allocation2], 4
      %s18 = int_to_ptr.vmem [resolvable:$true] %s17
      %20 = dma.hbm_to_vmem [thread:$0]  %s16, 64, %s18, [#allocation3]
    $region5: #{tpu_custom_call.1} parent=1 // pred_fallthru
      _
    // Predicated region
    $region6: #{tpu_custom_call.1} parent=1 // pred_check
      _
    $region7: #{tpu_custom_call.1} parent=1 // pred_check_branch
      %22 = sbr.rel (0) target = $region9
    $region8: #{tpu_custom_call.1} parent=1 // pred_region
      %24 = vsyncadd [#allocation6], 0
      %s26 = sshll.u32 %s1, 4
      %s27 = int_to_ptr.hbm [resolvable:$true] %s26
      %s28 = sshll.u32 [#allocation5], 4
      %s29 = int_to_ptr.vmem [resolvable:$true] %s28
      %31 = dma.hbm_to_vmem [thread:$0]  %s27, 32, %s29, [#allocation6]
    $region9: #{tpu_custom_call.1} parent=1 // pred_fallthru
      _
    // Predicated region
    $region10: #{tpu_custom_call.1} parent=1 // pred_check
      _
    $region11: #{tpu_custom_call.1} parent=1 // pred_check_branch
      %33 = sbr.rel (0) target = $region13
    $region12: #{tpu_custom_call.1} parent=1 // pred_region
      %35 = dma.done [#allocation3], 64
    $region13: #{tpu_custom_call.1} parent=1 // pred_fallthru
      _
    // Predicated region
    $region14: #{tpu_custom_call.1} parent=1 // pred_check
      _
    $region15: #{tpu_custom_call.1} parent=1 // pred_check_branch
      %37 = sbr.rel (0) target = $region17
    $region16: #{tpu_custom_call.1} parent=1 // pred_region
      %39 = dma.done [#allocation6], 32
    $region17: #{tpu_custom_call.1} parent=1 // pred_fallthru
      _
    %v40 = vld [vmem:[#allocation2] sm:$0xf]
    %v41 = vld [vmem:[#allocation5] sm:$0x3]
    %v43 = vperm.slane %v41, 0
    %v44 = vperm.slane %v41, 1
    %v45 = vrot.slane %v44, 6
    %vm46 = vcmask 1041408
    %v47 = vsel %vm46, %v43, %v45
    %v49 = vmul.f32 %v40, %v47
    %50 = vst [vmem:[#allocation7] sm:$0xf] %v49
    // Predicated region
    $region18: #{tpu_custom_call.1} parent=1 // pred_check
      _
    $region19: #{tpu_custom_call.1} parent=1 // pred_check_branch
      %52 = sbr.rel (0) target = $region21
    $region20: #{tpu_custom_call.1} parent=1 // pred_region
      %54 = vsyncadd [#allocation4], 0
      %s56 = sshll.u32 [#allocation7], 4
      %s57 = int_to_ptr.vmem [resolvable:$true] %s56
      %s58 = sshll.u32 %s2, 4
      %s59 = int_to_ptr.hbm [resolvable:$true] %s58
      %61 = dma.vmem_to_hbm [thread:$0]  %s57, 64, %s59, [#allocation4]
    $region21: #{tpu_custom_call.1} parent=1 // pred_fallthru
      _
    // Predicated region
    $region22: #{tpu_custom_call.1} parent=1 // pred_check
      _
    $region23: #{tpu_custom_call.1} parent=1 // pred_check_branch
      %63 = sbr.rel (0) target = $region25
    $region24: #{tpu_custom_call.1} parent=1 // pred_region
      %65 = dma.done [#allocation4], 64
    $region25: #{tpu_custom_call.1} parent=1 // pred_fallthru
      _
    %66 = vsyncpa [#allocation3], 1
    %67 = vsyncpa [#allocation6], 1
    %68 = vsyncpa [#allocation4], 1

</llo_original>
